<compile_context>
chip_gen: v7x
topology: tpu7x:2x2x1
jax: 0.10.0
libtpu: 0.0.40
codegen_flags: <defaults>
</compile_context>

<pallas_src>
import functools

import jax
import jax.numpy as jnp
import numpy as np
from jax import lax
from jax.experimental import pallas as pl
from jax.experimental.pallas import tpu as pltpu

SHRINK_THRESHOLD = 0.0025
SHRINK_EPS = 1e-12
NORM_EPS = 1e-12
_VMEM_LIMIT = 32 * 1024 * 1024   # explicit; fits v7x (64 MiB phys) and v5e/v6e


def _hard_shrink_relu(att, lam=SHRINK_THRESHOLD, eps=SHRINK_EPS):
    d = att - lam
    return jnp.maximum(d, 0.0) * att / (jnp.abs(d) + eps)


def _round_up(x, m):
    return ((x + m - 1) // m) * m


# ---------------------------------------------------------------------------
# update kernel: gated memory write, tiled over N (2-phase reduction grid)
# ---------------------------------------------------------------------------
def _update_kernel(q_ref, mem_ref, uwt_ref, wwt_ref, bias_ref, newmem_ref,
                   m_sc, l_sc, l1_sc, add_sc, *, n_valid, needs_mask):
    p = pl.program_id(0)            # phase: 0 -> softmax stats, 1 -> accumulate+gate
    k = pl.program_id(1)            # tile index along N
    nk = pl.num_programs(1)
    tile_n = q_ref.shape[0]

    mem = mem_ref[...]                               # (M, C) f32, resident
    qf = q_ref[...].astype(jnp.float32)              # (TU, C) upcast in VMEM

    if needs_mask:
        # Last tile is partial: out-of-bounds q rows are unspecified VMEM and
        # may hold inf/NaN bit patterns -> zero them before any matmul.
        row = k * tile_n + lax.broadcasted_iota(jnp.int32, (tile_n, 1), 0)
        qf = jnp.where(row < n_valid, qf, 0.0)

    # scores: (M, TU) = mem . q^T, contract C (no in-kernel transpose)
    s = lax.dot_general(mem, qf, (((1,), (1,)), ((), ())),
                        preferred_element_type=jnp.float32)
    if needs_mask:
        col = k * tile_n + lax.broadcasted_iota(jnp.int32, s.shape, 1)
        s = jnp.where(col < n_valid, s, -jnp.inf)    # softmax is over N -> mask cols

    @pl.when(p == 0)
    def _():                                          # online softmax stats over N
        @pl.when(k == 0)
        def _():
            m_sc[...] = jnp.full_like(m_sc, -jnp.inf)
            l_sc[...] = jnp.zeros_like(l_sc)
        m_prev = m_sc[...]
        m_new = jnp.maximum(m_prev, jnp.max(s, axis=-1, keepdims=True))
        l_sc[...] = (l_sc[...] * jnp.exp(m_prev - m_new)
                     + jnp.sum(jnp.exp(s - m_new), axis=-1, keepdims=True))
        m_sc[...] = m_new

    @pl.when(p == 1)
    def _():                                          # exact softmax + shrink + accumulate
        @pl.when(k == 0)
        def _():
            l1_sc[...] = jnp.zeros_like(l1_sc)
            add_sc[...] = jnp.zeros_like(add_sc)
        att = jnp.exp(s - m_sc[...]) / l_sc[...]      # stats from phase 0 (l >= 1)
        att = _hard_shrink_relu(att)
        l1_sc[...] += jnp.sum(jnp.abs(att), axis=-1, keepdims=True)
        add_sc[...] += jnp.dot(att, qf, preferred_element_type=jnp.float32)

        @pl.when(k == nk - 1)
        def _():                                      # finalize: L1 norm, gate, write
            add_mem = add_sc[...] / jnp.maximum(l1_sc[...], NORM_EPS)
            pre_gate = (jnp.dot(mem, uwt_ref[...], preferred_element_type=jnp.float32)
                        + jnp.dot(add_mem, wwt_ref[...], preferred_element_type=jnp.float32)
                        + bias_ref[...])
            gate = jax.nn.sigmoid(pre_gate)
            newmem_ref[...] = (1.0 - gate) * mem + gate * add_mem


# ---------------------------------------------------------------------------
# read kernel: attention over (updated) memory, tiled over N
# ---------------------------------------------------------------------------
def _read_kernel(q_ref, mem_ref, out_ref, attnT_ref):
    feat = mem_ref.shape[1]
    qf = q_ref[...].astype(jnp.float32)              # (TN, C)
    mem = mem_ref[...]                               # (M, C)

    # Attention kept TRANSPOSED as (M, TN) -> lane-dense stores. Softmax and
    # L1-normalization are both over M (axis 0, i.e. per column), so a partial
    # last tile (unspecified extra q rows) cannot contaminate valid columns and
    # no masking/padding is required; Pallas discards the OOB part on write-back.
    s = lax.dot_general(mem, qf, (((1,), (1,)), ((), ())),
                        preferred_element_type=jnp.float32)     # (M, TN)
    s = s - jnp.max(s, axis=0, keepdims=True)
    e = jnp.exp(s)
    att = e / jnp.sum(e, axis=0, keepdims=True)                 # softmax over M
    att = _hard_shrink_relu(att)
    att = att / jnp.maximum(jnp.sum(jnp.abs(att), axis=0, keepdims=True), NORM_EPS)
    attnT_ref[...] = att

    # add_memory = att^T . mem : contract M -> (TN, C)
    add_mem = lax.dot_general(att, mem, (((0,), (0,)), ((), ())),
                              preferred_element_type=jnp.float32)
    # fused torch.cat((query, add_memory), dim=1) as two sub-stores
    out_ref[:, :feat] = qf.astype(out_ref.dtype)
    out_ref[:, feat:] = add_mem.astype(out_ref.dtype)


# ---------------------------------------------------------------------------
# wrapper
# ---------------------------------------------------------------------------
def memory_layer_forward(query, memory, u_w, u_b, w_w, w_b, *,
                         mode="train", update_tile_n=None):
    shape = query.shape
    dims = len(shape)
    if dims not in (2, 3):
        raise TypeError("Wrong input dimension")
    C = shape[-1]
    M = memory.shape[0]
    # Keep q in its native dtype (bf16 stays bf16 -> halves the dominant HBM
    # read); kernels upcast tiles inside VMEM.
    q2d = query.reshape(-1, C)
    N = q2d.shape[0]
    mem = memory.astype(jnp.float32)

    if mode != "test":
        # hoisted once to XLA: weight transposes + summed bias
        uw_t = u_w.astype(jnp.float32).T
        ww_t = w_w.astype(jnp.float32).T
        bias = (u_b.astype(jnp.float32) + w_b.astype(jnp.float32)).reshape(1, C)

        if update_tile_n is None:
            TU = N if N <= 8192 else 8192
        else:
            TU = min(update_tile_n, N)
        if TU < N:
            TU = _round_up(TU, 8)
            if TU >= N:
                TU = N
        kt = -(-N // TU)
        needs_mask = (N % TU) != 0

        mem = pl.pallas_call(
            functools.partial(_update_kernel, n_valid=N, needs_mask=needs_mask),
            out_shape=jax.ShapeDtypeStruct((M, C), jnp.float32),
            grid=(2, kt),                                   # (phase, N tiles)
            in_specs=[
                pl.BlockSpec((TU, C), lambda p, k: (k, 0)),  # streamed q tiles
                pl.BlockSpec((M, C), lambda p, k: (0, 0)),   # memory, resident
                pl.BlockSpec((C, C), lambda p, k: (0, 0)),   # U.weight.T
                pl.BlockSpec((C, C), lambda p, k: (0, 0)),   # W.weight.T
                pl.BlockSpec((1, C), lambda p, k: (0, 0)),   # u_b + w_b
            ],
            out_specs=pl.BlockSpec((M, C), lambda p, k: (0, 0)),
            scratch_shapes=[
                pltpu.VMEM((M, 1), jnp.float32),   # running max over N
                pltpu.VMEM((M, 1), jnp.float32),   # running sum(exp)
                pltpu.VMEM((M, 1), jnp.float32),   # L1 norm of shrunk attention
                pltpu.VMEM((M, C), jnp.float32),   # shrunk-attention @ q accumulator
            ],
            compiler_params=pltpu.CompilerParams(
                dimension_semantics=("arbitrary", "arbitrary"),
                vmem_limit_bytes=_VMEM_LIMIT,
            ),
        )(q2d, mem, uw_t, ww_t, bias)

    # ---- read path: tiled over N, "parallel" so v7x shards tiles over both TCs
    if N <= 256:
        TN = N                                  # single full-dim block (always legal)
    else:
        # Big tiles (kernel is HBM-bound) but >=2 grid steps for v7x; multiple
        # of 128 keeps the lane-dense (M, TN) attention block legal when it
        # does not divide N (no wrapper-side padding / slicing).
        TN = min(8192, max(256, _round_up(-(-N // 2), 128)))
        if TN >= N:
            TN = N
    grid_n = -(-N // TN)

    out2d, attn_t = pl.pallas_call(
        _read_kernel,
        out_shape=(jax.ShapeDtypeStruct((N, 2 * C), jnp.float32),
                   jax.ShapeDtypeStruct((M, N), jnp.float32)),
        grid=(grid_n,),
        in_specs=[
            pl.BlockSpec((TN, C), lambda i: (i, 0)),      # query row tile (native dtype)
            pl.BlockSpec((M, C), lambda i: (0, 0)),       # (updated) memory, resident
        ],
        out_specs=(
            pl.BlockSpec((TN, 2 * C), lambda i: (i, 0)),  # fused [query | add_memory]
            pl.BlockSpec((M, TN), lambda i: (0, i)),      # attention, lane-dense
        ),
        compiler_params=pltpu.CompilerParams(
            dimension_semantics=("parallel",),
            vmem_limit_bytes=_VMEM_LIMIT,
        ),
    )(q2d, mem)

    read_query = out2d
    # Module semantics require attention as (N, M); M is tiny so one XLA
    # transpose. If a downstream consumer accepts (M, N), return attn_t as-is.
    attn = attn_t.T
    if dims == 3:
        read_query = read_query.reshape(shape[0], shape[1], 2 * C)
        attn = attn.reshape(shape[0], shape[1], M)
    return {"output": read_query, "attention": attn, "memory_init_embedding": mem}


# ---------------------------------------------------------------------------
# independent pure-JAX reference (mirrors the PyTorch module)
# ---------------------------------------------------------------------------
def memory_layer_reference(query, memory, u_w, u_b, w_w, w_b, *, mode="train"):
    shape = query.shape
    q = query.reshape(-1, shape[-1]).astype(jnp.float32)
    mem = memory.astype(jnp.float32)

    def score(a, b):
        att = a @ b.T
        att = jax.nn.softmax(att, axis=-1)
        d = att - SHRINK_THRESHOLD
        att = jax.nn.relu(d) * att / (jnp.abs(d) + SHRINK_EPS)
        att = att / jnp.maximum(jnp.sum(jnp.abs(att), axis=1, keepdims=True), NORM_EPS)
        return att

    if mode != "test":
        att_u = score(mem, q)
        add_u = att_u @ q
        gate = jax.nn.sigmoid(mem @ u_w.T + u_b + add_u @ w_w.T + w_b)
        mem = (1.0 - gate) * mem + gate * add_u

    att_r = score(q, mem)
    add_r = att_r @ mem
    out = jnp.concatenate([q, add_r], axis=1)
    if len(shape) == 3:
        out = out.reshape(shape[0], shape[1], 2 * shape[2])
        att_r = att_r.reshape(shape[0], shape[1], memory.shape[0])
    return {"output": out, "attention": att_r, "memory_init_embedding": mem}


if __name__ == "__main__":
    key = jax.random.PRNGKey(0)
    C, M = 32, 8

    k_params, k1, k2, k3 = jax.random.split(key, 4)
    k_m, k_uw, k_ub, k_ww, k_wb = jax.random.split(k_params, 5)

    # memory = F.normalize(rand(M, C), dim=1)
    mem_raw = jax.random.uniform(k_m, (M, C), jnp.float32)
    memory = mem_raw / jnp.maximum(jnp.linalg.norm(mem_raw, axis=1, keepdims=True), 1e-12)

    # nn.Linear(C, C) default init: U(-1/sqrt(C), 1/sqrt(C))
    bound = float(1.0 / np.sqrt(C))
    u_w = jax.random.uniform(k_uw, (C, C), jnp.float32, -bound, bound)
    u_b = jax.random.uniform(k_ub, (C,), jnp.float32, -bound, bound)
    w_w = jax.random.uniform(k_ww, (C, C), jnp.float32, -bound, bound)
    w_b = jax.random.uniform(k_wb, (C,), jnp.float32, -bound, bound)

    fwd = jax.jit(memory_layer_forward, static_argnames=("mode", "update_tile_n"))

    cases = [
        # (name, query shape, mode, update_tile_n override)
        ("train_small_3d", (2, 8, C), "train", None),       # single-tile update + read
        ("train_tiled_update", (2, 9, C), "train", 8),      # multi-tile online softmax, masked partial tile
        ("test_tiled_read_2d", (1400, C), "test", None),    # multi-tile read, partial last block, 2-D input
    ]
    for (name, qshape, mode, tile), kq in zip(cases, (k1, k2, k3)):
        query = jax.random.normal(kq, qshape, jnp.float32)
        out = fwd(query, memory, u_w, u_b, w_w, w_b, mode=mode, update_tile_n=tile)
        jax.block_until_ready(out)

        ref = memory_layer_reference(query, memory, u_w, u_b, w_w, w_b, mode=mode)
        for name_k in ("output", "attention", "memory_init_embedding"):
            np.testing.assert_allclose(np.asarray(out[name_k]), np.asarray(ref[name_k]),
                                       rtol=1e-5, atol=1e-5, err_msg=f"{name}:{name_k}")
        if len(qshape) == 3:
            assert out["output"].shape == (qshape[0], qshape[1], 2 * C)
            assert out["attention"].shape == (qshape[0], qshape[1], M)
        else:
            assert out["output"].shape == (qshape[0], 2 * C)
            assert out["attention"].shape == (qshape[0], M)
        assert out["memory_init_embedding"].shape == (M, C)

    print("KERNEL_OK")
</pallas_src>

<mosaic_0001>
module attributes {stable_mosaic.version = 11 : i64} {
  func.func @_update_kernel(%arg0: i32, %arg1: i32, %arg2: memref<16x32xf32, #tpu.memory_space<vmem>>, %arg3: memref<8x32xf32, #tpu.memory_space<vmem>>, %arg4: memref<32x32xf32, #tpu.memory_space<vmem>>, %arg5: memref<32x32xf32, #tpu.memory_space<vmem>>, %arg6: memref<1x32xf32, #tpu.memory_space<vmem>>, %arg7: memref<8x32xf32, #tpu.memory_space<vmem>>, %arg8: memref<8x1xf32, #tpu.memory_space<vmem>>, %arg9: memref<8x1xf32, #tpu.memory_space<vmem>>, %arg10: memref<8x1xf32, #tpu.memory_space<vmem>>, %arg11: memref<8x32xf32, #tpu.memory_space<vmem>>) attributes {dimension_semantics = [#tpu.dimension_semantics<arbitrary>, #tpu.dimension_semantics<arbitrary>], iteration_bounds = array<i64: 2, 1>, scalar_prefetch = 0 : i64, scratch_operands = 4 : i64, tpu.core_type = #tpu.core_type<tc>, window_params = [{transform_indices = @transform_0, window_bounds = array<i64: 16, 32>}, {pipeline_mode = #tpu.pipeline_mode<synchronous>, transform_indices = @transform_1, window_bounds = array<i64: 8, 32>}, {pipeline_mode = #tpu.pipeline_mode<synchronous>, transform_indices = @transform_2, window_bounds = array<i64: 32, 32>}, {pipeline_mode = #tpu.pipeline_mode<synchronous>, transform_indices = @transform_3, window_bounds = array<i64: 32, 32>}, {pipeline_mode = #tpu.pipeline_mode<synchronous>, transform_indices = @transform_4, window_bounds = array<i64: 1, 32>}, {pipeline_mode = #tpu.pipeline_mode<synchronous>, transform_indices = @transform_5, window_bounds = array<i64: 8, 32>}]} {
    %c0 = arith.constant 0 : index
    %c0_0 = arith.constant 0 : index
    %0 = vector.load %arg3[%c0, %c0_0] : memref<8x32xf32, #tpu.memory_space<vmem>>, vector<8x32xf32>
    %c0_1 = arith.constant 0 : index
    %c0_2 = arith.constant 0 : index
    %1 = vector.load %arg2[%c0_1, %c0_2] : memref<16x32xf32, #tpu.memory_space<vmem>>, vector<16x32xf32>
    %cst = arith.constant dense<0.000000e+00> : vector<8x16xf32>
    %2 = tpu.matmul %0, %1, %cst {dimension_numbers = #tpu.dot_dimension_numbers<[1], [1], [0], [0], [0, 0, 1, 0], [], []>} : vector<8x32xf32>, vector<16x32xf32>, vector<8x16xf32> -> vector<8x16xf32>
    %c0_i32 = arith.constant 0 : i32
    %3 = arith.cmpi eq, %arg0, %c0_i32 : i32
    %4 = arith.extui %3 : i1 to i32
    %c0_i32_3 = arith.constant 0 : i32
    %5 = arith.cmpi ne, %4, %c0_i32_3 : i32
    scf.if %5 {
      %c0_i32_5 = arith.constant 0 : i32
      %9 = arith.cmpi eq, %arg1, %c0_i32_5 : i32
      %10 = arith.extui %9 : i1 to i32
      %c0_i32_6 = arith.constant 0 : i32
      %11 = arith.cmpi ne, %10, %c0_i32_6 : i32
      scf.if %11 {
        %cst_17 = arith.constant 0xFF800000 : f32
        %28 = vector.broadcast %cst_17 : f32 to vector<8x1xf32>
        %c0_18 = arith.constant 0 : index
        %c0_19 = arith.constant 0 : index
        %29 = vector.load %arg8[%c0_18, %c0_19] : memref<8x1xf32, #tpu.memory_space<vmem>>, vector<8x1xf32>
        tpu.vector_store %arg8[%c0_18, %c0_19], %28 {strides = array<i32>} : memref<8x1xf32, #tpu.memory_space<vmem>>, vector<8x1xf32>,
        %cst_20 = arith.constant 0.000000e+00 : f32
        %30 = vector.broadcast %cst_20 : f32 to vector<8x1xf32>
        %c0_21 = arith.constant 0 : index
        %c0_22 = arith.constant 0 : index
        %31 = vector.load %arg9[%c0_21, %c0_22] : memref<8x1xf32, #tpu.memory_space<vmem>>, vector<8x1xf32>
        tpu.vector_store %arg9[%c0_21, %c0_22], %30 {strides = array<i32>} : memref<8x1xf32, #tpu.memory_space<vmem>>, vector<8x1xf32>,
      } else {
      }
      %c0_7 = arith.constant 0 : index
      %c0_8 = arith.constant 0 : index
      %12 = vector.load %arg8[%c0_7, %c0_8] : memref<8x1xf32, #tpu.memory_space<vmem>>, vector<8x1xf32>
      %cst_9 = arith.constant dense<0xFF800000> : vector<8xf32>
      %13 = vector.multi_reduction <maximumf>, %2, %cst_9 [1] : vector<8x16xf32> to vector<8xf32>
      %14 = vector.shape_cast %13 : vector<8xf32> to vector<8x1xf32>
      %15 = arith.maximumf %12, %14 : vector<8x1xf32>
      %c0_10 = arith.constant 0 : index
      %c0_11 = arith.constant 0 : index
      %16 = vector.load %arg9[%c0_10, %c0_11] : memref<8x1xf32, #tpu.memory_space<vmem>>, vector<8x1xf32>
      %17 = arith.subf %12, %15 : vector<8x1xf32>
      %18 = math.exp %17 : vector<8x1xf32>
      %19 = arith.mulf %16, %18 : vector<8x1xf32>
      %20 = vector.broadcast %15 : vector<8x1xf32> to vector<8x16xf32>
      %21 = arith.subf %2, %20 : vector<8x16xf32>
      %22 = math.exp %21 : vector<8x16xf32>
      %cst_12 = arith.constant dense<0.000000e+00> : vector<8xf32>
      %23 = vector.multi_reduction <add>, %22, %cst_12 [1] : vector<8x16xf32> to vector<8xf32>
      %24 = vector.shape_cast %23 : vector<8xf32> to vector<8x1xf32>
      %25 = arith.addf %19, %24 : vector<8x1xf32>
      %c0_13 = arith.constant 0 : index
      %c0_14 = arith.constant 0 : index
      %26 = vector.load %arg9[%c0_13, %c0_14] : memref<8x1xf32, #tpu.memory_space<vmem>>, vector<8x1xf32>
      tpu.vector_store %arg9[%c0_13, %c0_14], %25 {strides = array<i32>} : memref<8x1xf32, #tpu.memory_space<vmem>>, vector<8x1xf32>,
      %c0_15 = arith.constant 0 : index
      %c0_16 = arith.constant 0 : index
      %27 = vector.load %arg8[%c0_15, %c0_16] : memref<8x1xf32, #tpu.memory_space<vmem>>, vector<8x1xf32>
      tpu.vector_store %arg8[%c0_15, %c0_16], %15 {strides = array<i32>} : memref<8x1xf32, #tpu.memory_space<vmem>>, vector<8x1xf32>,
    } else {
    }
    %c1_i32 = arith.constant 1 : i32
    %6 = arith.cmpi eq, %arg0, %c1_i32 : i32
    %7 = arith.extui %6 : i1 to i32
    %c0_i32_4 = arith.constant 0 : i32
    %8 = arith.cmpi ne, %7, %c0_i32_4 : i32
    scf.if %8 {
      %c0_i32_5 = arith.constant 0 : i32
      %9 = arith.cmpi eq, %arg1, %c0_i32_5 : i32
      %10 = arith.extui %9 : i1 to i32
      %c0_i32_6 = arith.constant 0 : i32
      %11 = arith.cmpi ne, %10, %c0_i32_6 : i32
      scf.if %11 {
        %cst_26 = arith.constant 0.000000e+00 : f32
        %41 = vector.broadcast %cst_26 : f32 to vector<8x1xf32>
        %c0_27 = arith.constant 0 : index
        %c0_28 = arith.constant 0 : index
        %42 = vector.load %arg10[%c0_27, %c0_28] : memref<8x1xf32, #tpu.memory_space<vmem>>, vector<8x1xf32>
        tpu.vector_store %arg10[%c0_27, %c0_28], %41 {strides = array<i32>} : memref<8x1xf32, #tpu.memory_space<vmem>>, vector<8x1xf32>,
        %cst_29 = arith.constant 0.000000e+00 : f32
        %43 = vector.broadcast %cst_29 : f32 to vector<8x32xf32>
        %c0_30 = arith.constant 0 : index
        %c0_31 = arith.constant 0 : index
        %44 = vector.load %arg11[%c0_30, %c0_31] : memref<8x32xf32, #tpu.memory_space<vmem>>, vector<8x32xf32>
        tpu.vector_store %arg11[%c0_30, %c0_31], %43 {strides = array<i32>} : memref<8x32xf32, #tpu.memory_space<vmem>>, vector<8x32xf32>,
      } else {
      }
      %c0_7 = arith.constant 0 : index
      %c0_8 = arith.constant 0 : index
      %12 = vector.load %arg8[%c0_7, %c0_8] : memref<8x1xf32, #tpu.memory_space<vmem>>, vector<8x1xf32>
      %13 = vector.broadcast %12 : vector<8x1xf32> to vector<8x16xf32>
      %14 = arith.subf %2, %13 : vector<8x16xf32>
      %15 = math.exp %14 : vector<8x16xf32>
      %c0_9 = arith.constant 0 : index
      %c0_10 = arith.constant 0 : index
      %16 = vector.load %arg9[%c0_9, %c0_10] : memref<8x1xf32, #tpu.memory_space<vmem>>, vector<8x1xf32>
      %17 = vector.broadcast %16 : vector<8x1xf32> to vector<8x16xf32>
      %18 = arith.divf %15, %17 : vector<8x16xf32>
      %cst_11 = arith.constant 2.500000e-03 : f32
      %19 = vector.broadcast %cst_11 : f32 to vector<8x16xf32>
      %20 = arith.subf %18, %19 : vector<8x16xf32>
      %cst_12 = arith.constant 0.000000e+00 : f32
      %21 = vector.broadcast %cst_12 : f32 to vector<8x16xf32>
      %22 = arith.maximumf %20, %21 : vector<8x16xf32>
      %23 = arith.mulf %22, %18 : vector<8x16xf32>
      %24 = math.absf %20 : vector<8x16xf32>
      %cst_13 = arith.constant 9.99999996E-13 : f32
      %25 = vector.broadcast %cst_13 : f32 to vector<8x16xf32>
      %26 = arith.addf %24, %25 : vector<8x16xf32>
      %27 = arith.divf %23, %26 : vector<8x16xf32>
      %c0_14 = arith.constant 0 : index
      %c0_15 = arith.constant 0 : index
      %28 = vector.load %arg10[%c0_14, %c0_15] : memref<8x1xf32, #tpu.memory_space<vmem>>, vector<8x1xf32>
      %29 = math.absf %27 : vector<8x16xf32>
      %cst_16 = arith.constant dense<0.000000e+00> : vector<8xf32>
      %30 = vector.multi_reduction <add>, %29, %cst_16 [1] : vector<8x16xf32> to vector<8xf32>
      %31 = vector.shape_cast %30 : vector<8xf32> to vector<8x1xf32>
      %32 = arith.addf %28, %31 : vector<8x1xf32>
      %c0_17 = arith.constant 0 : index
      %c0_18 = arith.constant 0 : index
      %33 = vector.load %arg10[%c0_17, %c0_18] : memref<8x1xf32, #tpu.memory_space<vmem>>, vector<8x1xf32>
      tpu.vector_store %arg10[%c0_17, %c0_18], %32 {strides = array<i32>} : memref<8x1xf32, #tpu.memory_space<vmem>>, vector<8x1xf32>,
      %c0_19 = arith.constant 0 : index
      %c0_20 = arith.constant 0 : index
      %34 = vector.load %arg11[%c0_19, %c0_20] : memref<8x32xf32, #tpu.memory_space<vmem>>, vector<8x32xf32>
      %cst_21 = arith.constant dense<0.000000e+00> : vector<8x32xf32>
      %35 = tpu.matmul %27, %1, %cst_21 {dimension_numbers = #tpu.dot_dimension_numbers<[1], [0], [0], [1], [0, 0, 1, 1], [], []>} : vector<8x16xf32>, vector<16x32xf32>, vector<8x32xf32> -> vector<8x32xf32>
      %36 = arith.addf %34, %35 : vector<8x32xf32>
      %c0_22 = arith.constant 0 : index
      %c0_23 = arith.constant 0 : index
      %37 = vector.load %arg11[%c0_22, %c0_23] : memref<8x32xf32, #tpu.memory_space<vmem>>, vector<8x32xf32>
      tpu.vector_store %arg11[%c0_22, %c0_23], %36 {strides = array<i32>} : memref<8x32xf32, #tpu.memory_space<vmem>>, vector<8x32xf32>,
      %c0_i32_24 = arith.constant 0 : i32
      %38 = arith.cmpi eq, %arg1, %c0_i32_24 : i32
      %39 = arith.extui %38 : i1 to i32
      %c0_i32_25 = arith.constant 0 : i32
      %40 = arith.cmpi ne, %39, %c0_i32_25 : i32
      scf.if %40 {
        %c0_26 = arith.constant 0 : index
        %c0_27 = arith.constant 0 : index
        %41 = vector.load %arg11[%c0_26, %c0_27] : memref<8x32xf32, #tpu.memory_space<vmem>>, vector<8x32xf32>
        %c0_28 = arith.constant 0 : index
        %c0_29 = arith.constant 0 : index
        %42 = vector.load %arg10[%c0_28, %c0_29] : memref<8x1xf32, #tpu.memory_space<vmem>>, vector<8x1xf32>
        %cst_30 = arith.constant 9.99999996E-13 : f32
        %43 = vector.broadcast %cst_30 : f32 to vector<8x1xf32>
        %44 = arith.maximumf %42, %43 : vector<8x1xf32>
        %45 = vector.broadcast %44 : vector<8x1xf32> to vector<8x32xf32>
        %46 = arith.divf %41, %45 : vector<8x32xf32>
        %c0_31 = arith.constant 0 : index
        %c0_32 = arith.constant 0 : index
        %47 = vector.load %arg4[%c0_31, %c0_32] : memref<32x32xf32, #tpu.memory_space<vmem>>, vector<32x32xf32>
        %cst_33 = arith.constant dense<0.000000e+00> : vector<8x32xf32>
        %48 = tpu.matmul %0, %47, %cst_33 {dimension_numbers = #tpu.dot_dimension_numbers<[1], [0], [0], [1], [0, 0, 1, 1], [], []>} : vector<8x32xf32>, vector<32x32xf32>, vector<8x32xf32> -> vector<8x32xf32>
        %c0_34 = arith.constant 0 : index
        %c0_35 = arith.constant 0 : index
        %49 = vector.load %arg5[%c0_34, %c0_35] : memref<32x32xf32, #tpu.memory_space<vmem>>, vector<32x32xf32>
        %cst_36 = arith.constant dense<0.000000e+00> : vector<8x32xf32>
        %50 = tpu.matmul %46, %49, %cst_36 {dimension_numbers = #tpu.dot_dimension_numbers<[1], [0], [0], [1], [0, 0, 1, 1], [], []>} : vector<8x32xf32>, vector<32x32xf32>, vector<8x32xf32> -> vector<8x32xf32>
        %51 = arith.addf %48, %50 : vector<8x32xf32>
        %c0_37 = arith.constant 0 : index
        %c0_38 = arith.constant 0 : index
        %52 = vector.load %arg6[%c0_37, %c0_38] : memref<1x32xf32, #tpu.memory_space<vmem>>, vector<1x32xf32>
        %53 = vector.broadcast %52 : vector<1x32xf32> to vector<8x32xf32>
        %54 = arith.addf %51, %53 : vector<8x32xf32>
        %55 = arith.negf %54 : vector<8x32xf32>
        %56 = math.exp %55 : vector<8x32xf32>
        %cst_39 = arith.constant 1.000000e+00 : f32
        %57 = vector.broadcast %cst_39 : f32 to vector<8x32xf32>
        %58 = arith.addf %57, %56 : vector<8x32xf32>
        %59 = arith.divf %57, %58 : vector<8x32xf32>
        %cst_40 = arith.constant 1.000000e+00 : f32
        %60 = vector.broadcast %cst_40 : f32 to vector<8x32xf32>
        %61 = arith.subf %60, %59 : vector<8x32xf32>
        %62 = arith.mulf %61, %0 : vector<8x32xf32>
        %63 = arith.mulf %59, %46 : vector<8x32xf32>
        %64 = arith.addf %62, %63 : vector<8x32xf32>
        %c0_41 = arith.constant 0 : index
        %c0_42 = arith.constant 0 : index
        %65 = vector.load %arg7[%c0_41, %c0_42] : memref<8x32xf32, #tpu.memory_space<vmem>>, vector<8x32xf32>
        tpu.vector_store %arg7[%c0_41, %c0_42], %64 {strides = array<i32>} : memref<8x32xf32, #tpu.memory_space<vmem>>, vector<8x32xf32>,
      } else {
      }
    } else {
    }
    return
  }
  func.func @transform_0(%arg0: i32, %arg1: i32) -> (i32, i32) {
    %c0_i32 = arith.constant 0 : i32
    %c0_i32_0 = arith.constant 0 : i32
    return %arg1, %c0_i32 : i32, i32
  }
  func.func @transform_1(%arg0: i32, %arg1: i32) -> (i32, i32) {
    %c0_i32 = arith.constant 0 : i32
    %c0_i32_0 = arith.constant 0 : i32
    %c0_i32_1 = arith.constant 0 : i32
    return %c0_i32, %c0_i32_0 : i32, i32
  }
  func.func @transform_2(%arg0: i32, %arg1: i32) -> (i32, i32) {
    %c0_i32 = arith.constant 0 : i32
    %c0_i32_0 = arith.constant 0 : i32
    %c0_i32_1 = arith.constant 0 : i32
    return %c0_i32, %c0_i32_0 : i32, i32
  }
  func.func @transform_3(%arg0: i32, %arg1: i32) -> (i32, i32) {
    %c0_i32 = arith.constant 0 : i32
    %c0_i32_0 = arith.constant 0 : i32
    %c0_i32_1 = arith.constant 0 : i32
    return %c0_i32, %c0_i32_0 : i32, i32
  }
  func.func @transform_4(%arg0: i32, %arg1: i32) -> (i32, i32) {
    %c0_i32 = arith.constant 0 : i32
    %c0_i32_0 = arith.constant 0 : i32
    %c0_i32_1 = arith.constant 0 : i32
    return %c0_i32, %c0_i32_0 : i32, i32
  }
  func.func @transform_5(%arg0: i32, %arg1: i32) -> (i32, i32) {
    %c0_i32 = arith.constant 0 : i32
    %c0_i32_0 = arith.constant 0 : i32
    %c0_i32_1 = arith.constant 0 : i32
    return %c0_i32, %c0_i32_0 : i32, i32
  }
}

module attributes {stable_mosaic.version = 11 : i64} {
  func.func @_read_kernel(%arg0: i32, %arg1: memref<16x32xf32, #tpu.memory_space<vmem>>, %arg2: memref<8x32xf32, #tpu.memory_space<vmem>>, %arg3: memref<16x64xf32, #tpu.memory_space<vmem>>, %arg4: memref<8x16xf32, #tpu.memory_space<vmem>>) attributes {dimension_semantics = [#tpu.dimension_semantics<parallel>], iteration_bounds = array<i64: 1>, scalar_prefetch = 0 : i64, scratch_operands = 0 : i64, tpu.core_type = #tpu.core_type<tc>, window_params = [{transform_indices = @transform_0, window_bounds = array<i64: 16, 32>}, {pipeline_mode = #tpu.pipeline_mode<synchronous>, transform_indices = @transform_1, window_bounds = array<i64: 8, 32>}, {transform_indices = @transform_2, window_bounds = array<i64: 16, 64>}, {transform_indices = @transform_3, window_bounds = array<i64: 8, 16>}]} {
    %c0 = arith.constant 0 : index
    %c0_0 = arith.constant 0 : index
    %0 = vector.load %arg1[%c0, %c0_0] : memref<16x32xf32, #tpu.memory_space<vmem>>, vector<16x32xf32>
    %c0_1 = arith.constant 0 : index
    %c0_2 = arith.constant 0 : index
    %1 = vector.load %arg2[%c0_1, %c0_2] : memref<8x32xf32, #tpu.memory_space<vmem>>, vector<8x32xf32>
    %cst = arith.constant dense<0.000000e+00> : vector<8x16xf32>
    %2 = tpu.matmul %1, %0, %cst {dimension_numbers = #tpu.dot_dimension_numbers<[1], [1], [0], [0], [0, 0, 1, 0], [], []>} : vector<8x32xf32>, vector<16x32xf32>, vector<8x16xf32> -> vector<8x16xf32>
    %cst_3 = arith.constant dense<0xFF800000> : vector<16xf32>
    %3 = vector.multi_reduction <maximumf>, %2, %cst_3 [0] : vector<8x16xf32> to vector<16xf32>
    %4 = vector.shape_cast %3 : vector<16xf32> to vector<1x16xf32>
    %5 = vector.broadcast %4 : vector<1x16xf32> to vector<8x16xf32>
    %6 = arith.subf %2, %5 : vector<8x16xf32>
    %7 = math.exp %6 : vector<8x16xf32>
    %cst_4 = arith.constant dense<0.000000e+00> : vector<16xf32>
    %8 = vector.multi_reduction <add>, %7, %cst_4 [0] : vector<8x16xf32> to vector<16xf32>
    %9 = vector.shape_cast %8 : vector<16xf32> to vector<1x16xf32>
    %10 = vector.broadcast %9 : vector<1x16xf32> to vector<8x16xf32>
    %11 = arith.divf %7, %10 : vector<8x16xf32>
    %cst_5 = arith.constant 2.500000e-03 : f32
    %12 = vector.broadcast %cst_5 : f32 to vector<8x16xf32>
    %13 = arith.subf %11, %12 : vector<8x16xf32>
    %cst_6 = arith.constant 0.000000e+00 : f32
    %14 = vector.broadcast %cst_6 : f32 to vector<8x16xf32>
    %15 = arith.maximumf %13, %14 : vector<8x16xf32>
    %16 = arith.mulf %15, %11 : vector<8x16xf32>
    %17 = math.absf %13 : vector<8x16xf32>
    %cst_7 = arith.constant 9.99999996E-13 : f32
    %18 = vector.broadcast %cst_7 : f32 to vector<8x16xf32>
    %19 = arith.addf %17, %18 : vector<8x16xf32>
    %20 = arith.divf %16, %19 : vector<8x16xf32>
    %21 = math.absf %20 : vector<8x16xf32>
    %cst_8 = arith.constant dense<0.000000e+00> : vector<16xf32>
    %22 = vector.multi_reduction <add>, %21, %cst_8 [0] : vector<8x16xf32> to vector<16xf32>
    %23 = vector.shape_cast %22 : vector<16xf32> to vector<1x16xf32>
    %cst_9 = arith.constant 9.99999996E-13 : f32
    %24 = vector.broadcast %cst_9 : f32 to vector<1x16xf32>
    %25 = arith.maximumf %23, %24 : vector<1x16xf32>
    %26 = vector.broadcast %25 : vector<1x16xf32> to vector<8x16xf32>
    %27 = arith.divf %20, %26 : vector<8x16xf32>
    %c0_10 = arith.constant 0 : index
    %c0_11 = arith.constant 0 : index
    %28 = vector.load %arg4[%c0_10, %c0_11] : memref<8x16xf32, #tpu.memory_space<vmem>>, vector<8x16xf32>
    tpu.vector_store %arg4[%c0_10, %c0_11], %27 {strides = array<i32>} : memref<8x16xf32, #tpu.memory_space<vmem>>, vector<8x16xf32>,
    %cst_12 = arith.constant dense<0.000000e+00> : vector<16x32xf32>
    %29 = tpu.matmul %27, %1, %cst_12 {dimension_numbers = #tpu.dot_dimension_numbers<[0], [0], [1], [1], [0, 1, 1, 1], [], []>} : vector<8x16xf32>, vector<8x32xf32>, vector<16x32xf32> -> vector<16x32xf32>
    %c0_13 = arith.constant 0 : index
    %c0_14 = arith.constant 0 : index
    %30 = vector.load %arg3[%c0_13, %c0_14] : memref<16x64xf32, #tpu.memory_space<vmem>>, vector<16x32xf32>
    tpu.vector_store %arg3[%c0_13, %c0_14], %0 {strides = array<i32>} : memref<16x64xf32, #tpu.memory_space<vmem>>, vector<16x32xf32>,
    %c0_15 = arith.constant 0 : index
    %c32 = arith.constant 32 : index
    %31 = vector.load %arg3[%c0_15, %c32] : memref<16x64xf32, #tpu.memory_space<vmem>>, vector<16x32xf32>
    tpu.vector_store %arg3[%c0_15, %c32], %29 {strides = array<i32>} : memref<16x64xf32, #tpu.memory_space<vmem>>, vector<16x32xf32>,
    return
  }
  func.func @transform_0(%arg0: i32) -> (i32, i32) {
    %c0_i32 = arith.constant 0 : i32
    %c0_i32_0 = arith.constant 0 : i32
    return %arg0, %c0_i32 : i32, i32
  }
  func.func @transform_1(%arg0: i32) -> (i32, i32) {
    %c0_i32 = arith.constant 0 : i32
    %c0_i32_0 = arith.constant 0 : i32
    %c0_i32_1 = arith.constant 0 : i32
    return %c0_i32, %c0_i32_0 : i32, i32
  }
  func.func @transform_2(%arg0: i32) -> (i32, i32) {
    %c0_i32 = arith.constant 0 : i32
    %c0_i32_0 = arith.constant 0 : i32
    return %arg0, %c0_i32 : i32, i32
  }
  func.func @transform_3(%arg0: i32) -> (i32, i32) {
    %c0_i32 = arith.constant 0 : i32
    %c0_i32_0 = arith.constant 0 : i32
    return %c0_i32, %arg0 : i32, i32
  }
}

</mosaic_0001>

<llo_original>
// kernel: memory_layer_forward.3
$region0: #{memory_layer_forward.3}
  #allocation0 [shape = 'u32[]', space=smem, size = 0x4, offset = 0x4, fixed_abs, tag = 'smem constant byte address 0x4 - core index']
  #allocation1 [shape = 'u32[144,128]{1,0:T(1,128)}', space=vmem, size = 0x12000, scoped, tag = 'internal scratch']
  %s0 = inlined_call_operand.vmem [shape: f32[16,32], index: 0, kind: input, shape index: {}]
  %s1 = inlined_call_operand.vmem [shape: f32[8,32], index: 1, kind: input, shape index: {}]
  %s2 = inlined_call_operand.hbm [shape: f32[16,64], index: 2, kind: output, shape index: {0}]
  %s3 = inlined_call_operand.vmem [shape: f32[8,16], index: 3, kind: output, shape index: {1}]
  %4 = xla_tuple %s2, %s3
  %s5 = sld [smem:[#allocation0]]
  $region26: #{memory_layer_forward.3} parent=0
    _
  %s7 = ssub.s32 1, %s5
  %s8 = scalar_select 0, %s7, %s5
  $region1: #{memory_layer_forward.3} parent=0
    #allocation2 [shape = 'u8[8192]{0}', space=vmem, size = 0x2000, scoped, tag = 'output window, operand 0, single buffered']
    #allocation3 [shape = 's32[1]{0}', space=sflag, size = 0x4, scoped, tag = 'scoped memory for memory_layer_forward.3']
    %9 = vsyncpa [#allocation3], 0
    // Predicated region
    $region2: #{memory_layer_forward.3} parent=1 // pred_check
      _
    $region3: #{memory_layer_forward.3} parent=1 // pred_check_branch
      %11 = sbr.rel (0) target = $region5
    $region4: #{memory_layer_forward.3} parent=1 // pred_region
      _
    $region5: #{memory_layer_forward.3} parent=1 // pred_fallthru
      _
    // Predicated region
    $region6: #{memory_layer_forward.3} parent=1 // pred_check
      _
    $region7: #{memory_layer_forward.3} parent=1 // pred_check_branch
      %13 = sbr.rel (0) target = $region9
    $region8: #{memory_layer_forward.3} parent=1 // pred_region
      _
    $region9: #{memory_layer_forward.3} parent=1 // pred_fallthru
      _
    %v14 = vld [vmem:[%s0] sm:$0xff]
    %v15 = vld [vmem:[%s0 + $0x8] sm:$0xff]
    %v16 = vld [vmem:[%s1] sm:$0xff]
    %vm17 = vcmask 261120
    %v19 = vsel %vm17, %v16, 0
    %v22 = vsel %vm17, %v14, 0
    %v25 = vsel %vm17, %v15, 0
    %27 = vmatprep.subr.mxu0 0.0
    %28 = vmatpush1.xpose.msra.mxu0 %v22
    %29 = vmatprep.subr.mxu0 0.0
    %30 = vmatpush1.xpose.msra.mxu0 %v25
    %31 = vmatprep.subr.mxu0 0.0
    %32 = vmatpush1.xpose.msra.mxu0 0.0
    %33 = vmatprep.subr.mxu0 0.0
    %34 = vmatpush1.xpose.msra.mxu0 0.0
    %35 = vmatprep.subr.mxu0 0.0
    %36 = vmatpush1.xpose.msra.mxu0 0.0
    %37 = vmatprep.subr.mxu0 0.0
    %38 = vmatpush1.xpose.msra.mxu0 0.0
    %39 = vmatprep.subr.mxu0 0.0
    %40 = vmatpush1.xpose.msra.mxu0 0.0
    %41 = vmatprep.subr.mxu0 0.0
    %42 = vmatpush1.xpose.msra.mxu0 0.0
    %43 = vmatprep.subr.mxu0 0.0
    %44 = vmatpush1.xpose.msra.mxu0 0.0
    %45 = vmatprep.subr.mxu0 0.0
    %46 = vmatpush1.xpose.msra.mxu0 0.0
    %47 = vmatprep.subr.mxu0 0.0
    %48 = vmatpush1.xpose.msra.mxu0 0.0
    %49 = vmatprep.subr.mxu0 0.0
    %50 = vmatpush1.xpose.msra.mxu0 0.0
    %51 = vmatprep.subr.mxu0 0.0
    %52 = vmatpush1.xpose.msra.mxu0 0.0
    %53 = vmatprep.subr.mxu0 0.0
    %54 = vmatpush1.xpose.msra.mxu0 0.0
    %55 = vmatprep.subr.mxu0 0.0
    %56 = vmatpush1.xpose.msra.mxu0 0.0
    %57 = vmatprep.subr.mxu0 0.0
    %58 = vmatpush1.xpose.msra.mxu0 0.0
    %59 = vmatprep.subr.mxu0 0.0
    %60 = vmatpush1.xpose.msra.mxu0 0.0
    %61 = vmatprep.subr.mxu0 0.0
    %62 = vmatpush1.xpose.msra.mxu0 0.0
    %63 = vmatprep.subr.mxu0 0.0
    %64 = vmatpush1.xpose.msra.mxu0 0.0
    %65 = vmatprep.subr.mxu0 0.0
    %66 = vmatpush1.xpose.msra.mxu0 0.0
    %67 = vmatprep.subr.mxu0 0.0
    %68 = vmatpush1.xpose.msra.mxu0 0.0
    %69 = vmatprep.subr.mxu0 0.0
    %70 = vmatpush1.xpose.msra.mxu0 0.0
    %71 = vmatprep.subr.mxu0 0.0
    %72 = vmatpush1.xpose.msra.mxu0 0.0
    %73 = vmatprep.subr.mxu0 0.0
    %74 = vmatpush1.xpose.msra.mxu0 0.0
    %75 = vmatprep.subr.mxu0 0.0
    %76 = vmatpush1.xpose.msra.mxu0 0.0
    %77 = vmatprep.subr.mxu0 0.0
    %78 = vmatpush1.xpose.msra.mxu0 0.0
    %79 = vmatprep.subr.mxu0 0.0
    %80 = vmatpush1.xpose.msra.mxu0 0.0
    %81 = vmatprep.subr.mxu0 0.0
    %82 = vmatpush1.xpose.msra.mxu0 0.0
    %83 = vmatprep.subr.mxu0 0.0
    %84 = vmatpush1.xpose.msra.mxu0 0.0
    %85 = vmatprep.subr.mxu0 0.0
    %86 = vmatpush1.xpose.msra.mxu0 0.0
    %87 = vmatprep.subr.mxu0 0.0
    %88 = vmatpush1.xpose.msra.mxu0 0.0
    %89 = vmatprep.subr.mxu0 0.0
    %90 = vmatpush1.xpose.msra.mxu0 0.0
    %91 = vmatprep.mubr.f32.mxu0 0.0
    %92 = vmatmul.mubr.f32.gmra.mrb[0].mxu0 %v19
    %v93 = vpop.f32.mrb[0].mxu0
    %v94 = vadd.f32 0.0, %v93
    %v95 = vpop.f32.mrb[0].mxu0
    %96 = vdwg.mxu0
    %vm97 = vcmask 130048
    %v98 = vsel %vm97, %v94, -inf
    %v99 = vrot.slane %v98, 4
    %v100 = vmax.f32 %v98, %v99
    %v101 = vrot.slane %v100, 2
    %v102 = vmax.f32 %v100, %v101
    %v103 = vrot.slane %v102, 1
    %v104 = vmax.f32 %v102, %v103
    %v105 = vsub.f32 %v94, %v104
    %v106 = vmul.f32 %v105, 1.442695
    %v107 = vpow.pop %v106
    %v108 = vsel %vm97, %v107, 0.0
    %v109 = vrot.slane %v108, 4
    %v110 = vadd.f32 %v108, %v109
    %v111 = vrot.slane %v110, 2
    %v112 = vadd.f32 %v110, %v111
    %v113 = vrot.slane %v112, 1
    %v114 = vadd.f32 %v112, %v113
    %v115 = vrcp.pop %v114
    %v116 = vmul.f32 %v107, %v115
    %v117 = vsub.f32 %v116, 0.0025
    %v118 = vmax.f32 %v117, 0.0
    %v119 = vmul.f32 %v118, %v116
    %v120 = vand.u32 2147483647, %v117
    %v121 = vadd.f32 %v120, 1e-12
    %v122 = vrcp.pop %v121
    %v123 = vmul.f32 %v119, %v122
    %v124 = vand.u32 2147483647, %v123
    %v125 = vsel %vm97, %v124, 0.0
    %v126 = vrot.slane %v125, 4
    %v127 = vadd.f32 %v125, %v126
    %v128 = vrot.slane %v127, 2
    %v129 = vadd.f32 %v127, %v128
    %v130 = vrot.slane %v129, 1
    %v131 = vadd.f32 %v129, %v130
    %v132 = vmax.f32 %v131, 1e-12
    %v133 = vrcp.pop %v132
    %v134 = vmul.f32 %v123, %v133
    %135 = vst.msk [vmem:[%s3] sm:$0xff] %vm97, %v134
    %136 = vxpose.xlu0.b32.start [1/16] %v134, 128
    %137 = vxpose.xlu0.b32.cont [2/16] 0.0, 128
    %138 = vxpose.xlu0.b32.cont [3/16] 0.0, 128
    %139 = vxpose.xlu0.b32.cont [4/16] 0.0, 128
    %140 = vxpose.xlu0.b32.cont [5/16] 0.0, 128
    %141 = vxpose.xlu0.b32.cont [6/16] 0.0, 128
    %142 = vxpose.xlu0.b32.cont [7/16] 0.0, 128
    %143 = vxpose.xlu0.b32.cont [8/16] 0.0, 128
    %144 = vxpose.xlu0.b32.cont [9/16] 0.0, 128
    %145 = vxpose.xlu0.b32.cont [10/16] 0.0, 128
    %146 = vxpose.xlu0.b32.cont [11/16] 0.0, 128
    %147 = vxpose.xlu0.b32.cont [12/16] 0.0, 128
    %148 = vxpose.xlu0.b32.cont [13/16] 0.0, 128
    %149 = vxpose.xlu0.b32.cont [14/16] 0.0, 128
    %150 = vxpose.xlu0.b32.cont [15/16] 0.0, 128
    %151 = vxpose.xlu0.b32.end [16/16] 0.0, 128
    %v152 = vpop.trf.xlu0
    %v153 = vpop.trf.xlu0
    %v154 = vpop.trf.xlu0
    %v155 = vpop.trf.xlu0
    %v156 = vpop.trf.xlu0
    %v157 = vpop.trf.xlu0
    %v158 = vpop.trf.xlu0
    %v159 = vpop.trf.xlu0
    %v160 = vpop.trf.xlu0
    %v161 = vpop.trf.xlu0
    %v162 = vpop.trf.xlu0
    %v163 = vpop.trf.xlu0
    %v164 = vpop.trf.xlu0
    %v165 = vpop.trf.xlu0
    %v166 = vpop.trf.xlu0
    %v167 = vpop.trf.xlu0
    %vm168 = vcmask 64512
    %v170 = vsel %vm168, %v152, 0
    %v173 = vsel %vm168, %v153, 0
    %175 = vmatprep.subr.mxu0 0.0
    %176 = vmatpush1.msra.mxu0 %v16
    %177 = vmatprep.subr.mxu0 0.0
    %178 = vmatpush1.msra.mxu0 0.0
    %179 = vmatprep.subr.mxu0 0.0
    %180 = vmatpush1.msra.mxu0 0.0
    %181 = vmatprep.subr.mxu0 0.0
    %182 = vmatpush1.msra.mxu0 0.0
    %183 = vmatprep.subr.mxu0 0.0
    %184 = vmatpush1.msra.mxu0 0.0
    %185 = vmatprep.subr.mxu0 0.0
    %186 = vmatpush1.msra.mxu0 0.0
    %187 = vmatprep.subr.mxu0 0.0
    %188 = vmatpush1.msra.mxu0 0.0
    %189 = vmatprep.subr.mxu0 0.0
    %190 = vmatpush1.msra.mxu0 0.0
    %191 = vmatprep.subr.mxu0 0.0
    %192 = vmatpush1.msra.mxu0 0.0
    %193 = vmatprep.subr.mxu0 0.0
    %194 = vmatpush1.msra.mxu0 0.0
    %195 = vmatprep.subr.mxu0 0.0
    %196 = vmatpush1.msra.mxu0 0.0
    %197 = vmatprep.subr.mxu0 0.0
    %198 = vmatpush1.msra.mxu0 0.0
    %199 = vmatprep.subr.mxu0 0.0
    %200 = vmatpush1.msra.mxu0 0.0
    %201 = vmatprep.subr.mxu0 0.0
    %202 = vmatpush1.msra.mxu0 0.0
    %203 = vmatprep.subr.mxu0 0.0
    %204 = vmatpush1.msra.mxu0 0.0
    %205 = vmatprep.subr.mxu0 0.0
    %206 = vmatpush1.msra.mxu0 0.0
    %207 = vmatprep.subr.mxu0 0.0
    %208 = vmatpush1.msra.mxu0 0.0
    %209 = vmatprep.subr.mxu0 0.0
    %210 = vmatpush1.msra.mxu0 0.0
    %211 = vmatprep.subr.mxu0 0.0
    %212 = vmatpush1.msra.mxu0 0.0
    %213 = vmatprep.subr.mxu0 0.0
    %214 = vmatpush1.msra.mxu0 0.0
    %215 = vmatprep.subr.mxu0 0.0
    %216 = vmatpush1.msra.mxu0 0.0
    %217 = vmatprep.subr.mxu0 0.0
    %218 = vmatpush1.msra.mxu0 0.0
    %219 = vmatprep.subr.mxu0 0.0
    %220 = vmatpush1.msra.mxu0 0.0
    %221 = vmatprep.subr.mxu0 0.0
    %222 = vmatpush1.msra.mxu0 0.0
    %223 = vmatprep.subr.mxu0 0.0
    %224 = vmatpush1.msra.mxu0 0.0
    %225 = vmatprep.subr.mxu0 0.0
    %226 = vmatpush1.msra.mxu0 0.0
    %227 = vmatprep.subr.mxu0 0.0
    %228 = vmatpush1.msra.mxu0 0.0
    %229 = vmatprep.subr.mxu0 0.0
    %230 = vmatpush1.msra.mxu0 0.0
    %231 = vmatprep.subr.mxu0 0.0
    %232 = vmatpush1.msra.mxu0 0.0
    %233 = vmatprep.subr.mxu0 0.0
    %234 = vmatpush1.msra.mxu0 0.0
    %235 = vmatprep.subr.mxu0 0.0
    %236 = vmatpush1.msra.mxu0 0.0
    %237 = vmatprep.subr.mxu0 0.0
    %238 = vmatpush1.msra.mxu0 0.0
    %239 = vmatprep.mubr.f32.mxu0 0.0
    %240 = vmatmul.mubr.f32.gmra.mrb[0].mxu0 %v170
    %v241 = vpop.f32.mrb[0].mxu0
    %v242 = vadd.f32 0.0, %v241
    %v243 = vpop.f32.mrb[0].mxu0
    %244 = vmatprep.mubr.f32.mxu0 0.0
    %245 = vmatmul.mubr.f32.gmra.mrb[0].mxu0 %v173
    %v246 = vpop.f32.mrb[0].mxu0
    %v247 = vadd.f32 0.0, %v246
    %v248 = vpop.f32.mrb[0].mxu0
    %249 = vdwg.mxu0
    %250 = vst.msk [vmem:[#allocation2] sm:$0xff] %vm17, %v14
    %251 = vst.msk [vmem:[#allocation2 + $0x8] sm:$0xff] %vm17, %v15
    %254 = vrot.lane.b32.xlu0 %v242, 32
    %v255 = vpop.permute.xlu0 %254
    %256 = vrot.lane.b32.xlu0 %v247, 32
    %v257 = vpop.permute.xlu0 %256
    %vm260 = vcmask 523520
    %261 = vst.msk [vmem:[#allocation2] sm:$0xff] %vm260, %v255
    %262 = vst.msk [vmem:[#allocation2 + $0x8] sm:$0xff] %vm260, %v257
    // Predicated region
    $region10: #{memory_layer_forward.3} parent=1 // pred_check
      _
    $region11: #{memory_layer_forward.3} parent=1 // pred_check_branch
      %264 = sbr.rel (0) target = $region13
    $region12: #{memory_layer_forward.3} parent=1 // pred_region
      %s266 = ssub.s32 256, 256
      %267 = vsyncadd [#allocation3], %s266
      %s268 = sshll.u32 [#allocation2], 4
      %s269 = int_to_ptr.vmem [resolvable:$true] %s268
      %274 = dma.vmem_to_hbm [thread:$0]  %s269, 256, %s2, [#allocation3], 128, 128, 8
    $region13: #{memory_layer_forward.3} parent=1 // pred_fallthru
      _
    // Predicated region
    $region14: #{memory_layer_forward.3} parent=1 // pred_check
      _
    $region15: #{memory_layer_forward.3} parent=1 // pred_check_branch
      %276 = sbr.rel (0) target = $region17
    $region16: #{memory_layer_forward.3} parent=1 // pred_region
      _
    $region17: #{memory_layer_forward.3} parent=1 // pred_fallthru
      _
    // Predicated region
    $region18: #{memory_layer_forward.3} parent=1 // pred_check
      _
    $region19: #{memory_layer_forward.3} parent=1 // pred_check_branch
      %278 = sbr.rel (0) target = $region21
    $region20: #{memory_layer_forward.3} parent=1 // pred_region
      %279 = dma.done [#allocation3], 256
    $region21: #{memory_layer_forward.3} parent=1 // pred_fallthru
      _
    // Predicated region
    $region22: #{memory_layer_forward.3} parent=1 // pred_check
      _
    $region23: #{memory_layer_forward.3} parent=1 // pred_check_branch
      %281 = sbr.rel (0) target = $region25
    $region24: #{memory_layer_forward.3} parent=1 // pred_region
      _
    $region25: #{memory_layer_forward.3} parent=1 // pred_fallthru
      _
    %282 = vsyncpa [#allocation3], 1

// kernel: memory_layer_forward.2
$region0: #{memory_layer_forward.2}
  #allocation0 [shape = 'u32[]', space=smem, size = 0x4, offset = 0x4, fixed_abs, tag = 'smem constant byte address 0x4 - core index']
  #allocation1 [shape = 'u32[144,128]{1,0:T(1,128)}', space=vmem, size = 0x12000, scoped, tag = 'internal scratch']
  #allocation2 [shape = 'f32[8,1]{1,0:T(8,128)}', space=vmem, size = 0x1000, scoped, tag = 'scratch operand']
  #allocation3 [shape = 'f32[8,1]{1,0:T(8,128)}', space=vmem, size = 0x1000, scoped, tag = 'scratch operand']
  #allocation4 [shape = 'f32[8,1]{1,0:T(8,128)}', space=vmem, size = 0x1000, scoped, tag = 'scratch operand']
  #allocation5 [shape = 'f32[8,32]{1,0:T(8,128)}', space=vmem, size = 0x1000, scoped, tag = 'scratch operand']
  %s0 = inlined_call_operand.vmem [shape: f32[16,32], index: 0, kind: input, shape index: {}]
  %s1 = inlined_call_operand.vmem [shape: f32[8,32], index: 1, kind: input, shape index: {}]
  %s2 = inlined_call_operand.vmem [shape: f32[32,32], index: 2, kind: input, shape index: {}]
  %s3 = inlined_call_operand.vmem [shape: f32[32,32], index: 3, kind: input, shape index: {}]
  %s4 = inlined_call_operand.vmem [shape: f32[1,32], index: 4, kind: input, shape index: {}]
  %s5 = inlined_call_operand.vmem [shape: f32[8,32], index: 5, kind: output, shape index: {}]
  %s6 = sld [smem:[#allocation0]]
  $region73: #{memory_layer_forward.2} parent=0
    _
  %s8 = ssub.s32 1, %s6
  %s9 = scalar_select 0, %s8, %s6
  loop: start=0, step=1, limit=4
  $region2: #{memory_layer_forward.2} parent=0 // loop_pre_header
    _
  $region3: #{memory_layer_forward.2} parent=0 // loop_header
    %s11 = sphi 0, %s15
    %p12 = scmp.ge.s32.totalorder %s11, 4
    %s18 = sphi 0, %s30
    %s19 = sphi 0, %s26
    %s20 = sphi 0, %s18
    %s21 = sphi 0, %s19
    %s22 = sphi 0, %s20
    %s23 = sphi 0, %s21
    %s33 = sphi 0, %s35
    %s36 = sphi 0, %s33
    %s37 = sphi 0, %s36
    %s53 = sphi 0, %s37
    %s57 = sphi 0, %s57
    %s59 = sphi 0, %s57
    %s60 = sphi 0, %s59
    %s74 = sphi 0, %s60
    %s78 = sphi 0, %s78
    %s80 = sphi 0, %s78
    %s81 = sphi 0, %s80
    %s95 = sphi 0, %s81
    %s99 = sphi 0, %s99
    %s101 = sphi 0, %s99
    %s102 = sphi 0, %s101
    %s116 = sphi 0, %s102
    %s120 = sphi 0, %s120
    %s122 = sphi 0, %s120
    %s123 = sphi 0, %s122
    %s137 = sphi 0, %s123
    %s141 = sphi 0, %s141
    %s143 = sphi 0, %s141
    %s144 = sphi 0, %s143
    %s158 = sphi 0, %s144
  $region4: #{memory_layer_forward.2} parent=0 // loop_header_branch
    %14 = sbr.rel (%p12) target = $region8
  $region5: #{memory_layer_forward.2} parent=0 // loop_body
    %s16 = ssub.s32 %s11, 1
    %s17 = ssub.s32 %s11, 2
    %s24 = sadd.s32 1, %s19
    %p25 = scmp.ge.s32.totalorder %s24, 1
    %s26 = scalar_select %p25, 0, %s24
    %s27 = sadd.s32 1, %s18
    %s28 = scalar_select %p25, %s27, %s18
    %p29 = scmp.ge.s32.totalorder %s28, 2
    %s30 = scalar_select %p29, 0, %s28
    %s31 = ssub.s32 %s19, %s26
    %p32 = scmp.eq.s32.totalorder %s31, 0
    %s34 = sadd.s32 %s33, 1
    %s35 = scalar_select %p32, %s33, %s34
    %p38 = pneg %p32
    %p39 = scmp.eq.s32.totalorder %s11, 1
    %p40 = por %p38, %p39
    %p41 = scmp.ne.s32.totalorder %s33, %s36
    %p42 = scmp.eq.s32.totalorder %s11, 0
    %p43 = por %p41, %p42
    %p44 = scmp.ne.s32.totalorder %s33, %s36
    %p45 = scmp.eq.s32.totalorder %s16, 1
    %p46 = por %p44, %p45
    %p47 = scmp.ne.s32.totalorder %s36, %s37
    %p48 = scmp.eq.s32.totalorder %s16, 0
    %p49 = por %p47, %p48
    %p50 = scmp.ne.s32.totalorder %s36, %s37
    %p51 = scmp.eq.s32.totalorder %s17, 1
    %p52 = por %p50, %p51
    %p54 = scmp.ne.s32.totalorder %s37, %s53
    %p55 = scmp.eq.s32.totalorder %s17, 0
    %p56 = por %p54, %p55
    %s58 = sadd.s32 %s57, 1
    %p61 = scmp.eq.s32.totalorder %s11, 1
    %p62 = scmp.ne.s32.totalorder %s57, %s59
    %p63 = scmp.eq.s32.totalorder %s11, 0
    %p64 = por %p62, %p63
    %p65 = scmp.ne.s32.totalorder %s57, %s59
    %p66 = scmp.eq.s32.totalorder %s16, 1
    %p67 = por %p65, %p66
    %p68 = scmp.ne.s32.totalorder %s59, %s60
    %p69 = scmp.eq.s32.totalorder %s16, 0
    %p70 = por %p68, %p69
    %p71 = scmp.ne.s32.totalorder %s59, %s60
    %p72 = scmp.eq.s32.totalorder %s17, 1
    %p73 = por %p71, %p72
    %p75 = scmp.ne.s32.totalorder %s60, %s74
    %p76 = scmp.eq.s32.totalorder %s17, 0
    %p77 = por %p75, %p76
    %s79 = sadd.s32 %s78, 1
    %p82 = scmp.eq.s32.totalorder %s11, 1
    %p83 = scmp.ne.s32.totalorder %s78, %s80
    %p84 = scmp.eq.s32.totalorder %s11, 0
    %p85 = por %p83, %p84
    %p86 = scmp.ne.s32.totalorder %s78, %s80
    %p87 = scmp.eq.s32.totalorder %s16, 1
    %p88 = por %p86, %p87
    %p89 = scmp.ne.s32.totalorder %s80, %s81
    %p90 = scmp.eq.s32.totalorder %s16, 0
    %p91 = por %p89, %p90
    %p92 = scmp.ne.s32.totalorder %s80, %s81
    %p93 = scmp.eq.s32.totalorder %s17, 1
    %p94 = por %p92, %p93
    %p96 = scmp.ne.s32.totalorder %s81, %s95
    %p97 = scmp.eq.s32.totalorder %s17, 0
    %p98 = por %p96, %p97
    %s100 = sadd.s32 %s99, 1
    %p103 = scmp.eq.s32.totalorder %s11, 1
    %p104 = scmp.ne.s32.totalorder %s99, %s101
    %p105 = scmp.eq.s32.totalorder %s11, 0
    %p106 = por %p104, %p105
    %p107 = scmp.ne.s32.totalorder %s99, %s101
    %p108 = scmp.eq.s32.totalorder %s16, 1
    %p109 = por %p107, %p108
    %p110 = scmp.ne.s32.totalorder %s101, %s102
    %p111 = scmp.eq.s32.totalorder %s16, 0
    %p112 = por %p110, %p111
    %p113 = scmp.ne.s32.totalorder %s101, %s102
    %p114 = scmp.eq.s32.totalorder %s17, 1
    %p115 = por %p113, %p114
    %p117 = scmp.ne.s32.totalorder %s102, %s116
    %p118 = scmp.eq.s32.totalorder %s17, 0
    %p119 = por %p117, %p118
    %s121 = sadd.s32 %s120, 1
    %p124 = scmp.eq.s32.totalorder %s11, 1
    %p125 = scmp.ne.s32.totalorder %s120, %s122
    %p126 = scmp.eq.s32.totalorder %s11, 0
    %p127 = por %p125, %p126
    %p128 = scmp.ne.s32.totalorder %s120, %s122
    %p129 = scmp.eq.s32.totalorder %s16, 1
    %p130 = por %p128, %p129
    %p131 = scmp.ne.s32.totalorder %s122, %s123
    %p132 = scmp.eq.s32.totalorder %s16, 0
    %p133 = por %p131, %p132
    %p134 = scmp.ne.s32.totalorder %s122, %s123
    %p135 = scmp.eq.s32.totalorder %s17, 1
    %p136 = por %p134, %p135
    %p138 = scmp.ne.s32.totalorder %s123, %s137
    %p139 = scmp.eq.s32.totalorder %s17, 0
    %p140 = por %p138, %p139
    %s142 = sadd.s32 %s141, 1
    %p145 = scmp.eq.s32.totalorder %s11, 1
    %p146 = scmp.ne.s32.totalorder %s141, %s143
    %p147 = scmp.eq.s32.totalorder %s11, 0
    %p148 = por %p146, %p147
    %p149 = scmp.ne.s32.totalorder %s141, %s143
    %p150 = scmp.eq.s32.totalorder %s16, 1
    %p151 = por %p149, %p150
    %p152 = scmp.ne.s32.totalorder %s143, %s144
    %p153 = scmp.eq.s32.totalorder %s16, 0
    %p154 = por %p152, %p153
    %p155 = scmp.ne.s32.totalorder %s143, %s144
    %p156 = scmp.eq.s32.totalorder %s17, 1
    %p157 = por %p155, %p156
    %p159 = scmp.ne.s32.totalorder %s144, %s158
    %p160 = scmp.eq.s32.totalorder %s17, 0
    %p161 = por %p159, %p160
    %p162 = scmp.le.s32.totalorder 1, %s11
    %p163 = scmp.lt.s32.totalorder %s11, 3
    %p164 = pnand %p162, %p163
    %p165 = pneg %p164
    // Predicated region
    $region9: #{memory_layer_forward.2} parent=5 // pred_check
      _
    $region10: #{memory_layer_forward.2} parent=5 // pred_check_branch
      %167 = sbr.rel (%p164) target = $region12
    $region11: #{memory_layer_forward.2} parent=5 // pred_region
      %s168 = ssub.s32 %s11, 1
      // Predicated region
      $region13: #{memory_layer_forward.2} parent=11 // pred_check
        %p169 = pneg %p49
      $region14: #{memory_layer_forward.2} parent=11 // pred_check_branch
        %171 = sbr.rel (%p169) target = $region16
      $region15: #{memory_layer_forward.2} parent=11 // pred_region
        %s172 = smul.u32 2, %s21
        %p173 = scmp.lt.s32.totalorder %s172, 1
        %s174 = scalar_select %p173, %s172, 1
        %s175 = smul.addr %s174, 8
        %s176 = scalar_lea.vmem %s0, %s175
        %s177 = smul.u32 2, %s21
      $region16: #{memory_layer_forward.2} parent=11 // pred_fallthru
        _
      // Predicated region
      $region17: #{memory_layer_forward.2} parent=11 // pred_check
        %p178 = pneg %p70
      $region18: #{memory_layer_forward.2} parent=11 // pred_check_branch
        %180 = sbr.rel (%p178) target = $region20
      $region19: #{memory_layer_forward.2} parent=11 // pred_region
        _
      $region20: #{memory_layer_forward.2} parent=11 // pred_fallthru
        _
      // Predicated region
      $region21: #{memory_layer_forward.2} parent=11 // pred_check
        %p181 = pneg %p91
      $region22: #{memory_layer_forward.2} parent=11 // pred_check_branch
        %183 = sbr.rel (%p181) target = $region24
      $region23: #{memory_layer_forward.2} parent=11 // pred_region
        _
      $region24: #{memory_layer_forward.2} parent=11 // pred_fallthru
        _
      // Predicated region
      $region25: #{memory_layer_forward.2} parent=11 // pred_check
        %p184 = pneg %p112
      $region26: #{memory_layer_forward.2} parent=11 // pred_check_branch
        %186 = sbr.rel (%p184) target = $region28
      $region27: #{memory_layer_forward.2} parent=11 // pred_region
        _
      $region28: #{memory_layer_forward.2} parent=11 // pred_fallthru
        _
      // Predicated region
      $region29: #{memory_layer_forward.2} parent=11 // pred_check
        %p187 = pneg %p133
      $region30: #{memory_layer_forward.2} parent=11 // pred_check_branch
        %189 = sbr.rel (%p187) target = $region32
      $region31: #{memory_layer_forward.2} parent=11 // pred_region
        _
      $region32: #{memory_layer_forward.2} parent=11 // pred_fallthru
        _
    $region12: #{memory_layer_forward.2} parent=5 // pred_fallthru
      _
    %p190 = scmp.lt.s32.totalorder %s11, 2
    // Predicated region
    $region33: #{memory_layer_forward.2} parent=5 // pred_check
      %p191 = pneg %p190
    $region34: #{memory_layer_forward.2} parent=5 // pred_check_branch
      %193 = sbr.rel (%p191) target = $region36
    $region35: #{memory_layer_forward.2} parent=5 // pred_region
      _
    $region36: #{memory_layer_forward.2} parent=5 // pred_fallthru
      _
    %p194 = scmp.le.s32.totalorder 1, %s11
    %p195 = scmp.lt.s32.totalorder %s11, 3
    %p196 = pnand %p194, %p195
    %p197 = pneg %p196
    // Predicated region
    $region37: #{memory_layer_forward.2} parent=5 // pred_check
      _
    $region38: #{memory_layer_forward.2} parent=5 // pred_check_branch
      %199 = sbr.rel (%p196) target = $region40
    $region39: #{memory_layer_forward.2} parent=5 // pred_region
      %s200 = ssub.s32 %s11, 1
      %s201 = smul.u32 2, %s21
      %p202 = scmp.lt.s32.totalorder %s201, 1
      %s203 = scalar_select %p202, %s201, 1
      %s204 = smul.addr %s203, 8
      %s205 = scalar_lea.vmem %s0, %s204
      %p206 = pneg %p49
      %p207 = pneg %p46
      %p208 = pneg %p70
      %p209 = pneg %p67
      %p210 = pneg %p91
      %p211 = pneg %p88
      %p212 = pneg %p112
      %p213 = pneg %p109
      %p214 = pneg %p133
      %p215 = pneg %p130
      %p216 = pneg %p154
      %p217 = pneg %p151
      %s218 = smul.u32 2, %s21
      %p219 = scmp.lt.s32.totalorder %s218, 1
      %s220 = scalar_select %p219, %s218, 1
      %s221 = smul.addr %s220, 8
      %s222 = scalar_lea.vmem %s0, %s221
      %s223 = smul.u32 2, %s21
      %v224 = vld [vmem:[%s1] sm:$0xff]
      %v225 = vld [vmem:[%s222] sm:$0xff]
      %v226 = vld [vmem:[%s222 + $0x8] sm:$0xff]
      %vm227 = vcmask 261120
      %v229 = vsel %vm227, %v224, 0
      %v232 = vsel %vm227, %v225, 0
      %v235 = vsel %vm227, %v226, 0
      %237 = vmatprep.subr.mxu0 0.0
      %238 = vmatpush1.xpose.msra.mxu0 %v232
      %239 = vmatprep.subr.mxu0 0.0
      %240 = vmatpush1.xpose.msra.mxu0 %v235
      %241 = vmatprep.subr.mxu0 0.0
      %242 = vmatpush1.xpose.msra.mxu0 0.0
      %243 = vmatprep.subr.mxu0 0.0
      %244 = vmatpush1.xpose.msra.mxu0 0.0
      %245 = vmatprep.subr.mxu0 0.0
      %246 = vmatpush1.xpose.msra.mxu0 0.0
      %247 = vmatprep.subr.mxu0 0.0
      %248 = vmatpush1.xpose.msra.mxu0 0.0
      %249 = vmatprep.subr.mxu0 0.0
      %250 = vmatpush1.xpose.msra.mxu0 0.0
      %251 = vmatprep.subr.mxu0 0.0
      %252 = vmatpush1.xpose.msra.mxu0 0.0
      %253 = vmatprep.subr.mxu0 0.0
      %254 = vmatpush1.xpose.msra.mxu0 0.0
      %255 = vmatprep.subr.mxu0 0.0
      %256 = vmatpush1.xpose.msra.mxu0 0.0
      %257 = vmatprep.subr.mxu0 0.0
      %258 = vmatpush1.xpose.msra.mxu0 0.0
      %259 = vmatprep.subr.mxu0 0.0
      %260 = vmatpush1.xpose.msra.mxu0 0.0
      %261 = vmatprep.subr.mxu0 0.0
      %262 = vmatpush1.xpose.msra.mxu0 0.0
      %263 = vmatprep.subr.mxu0 0.0
      %264 = vmatpush1.xpose.msra.mxu0 0.0
      %265 = vmatprep.subr.mxu0 0.0
      %266 = vmatpush1.xpose.msra.mxu0 0.0
      %267 = vmatprep.subr.mxu0 0.0
      %268 = vmatpush1.xpose.msra.mxu0 0.0
      %269 = vmatprep.subr.mxu0 0.0
      %270 = vmatpush1.xpose.msra.mxu0 0.0
      %271 = vmatprep.subr.mxu0 0.0
      %272 = vmatpush1.xpose.msra.mxu0 0.0
      %273 = vmatprep.subr.mxu0 0.0
      %274 = vmatpush1.xpose.msra.mxu0 0.0
      %275 = vmatprep.subr.mxu0 0.0
      %276 = vmatpush1.xpose.msra.mxu0 0.0
      %277 = vmatprep.subr.mxu0 0.0
      %278 = vmatpush1.xpose.msra.mxu0 0.0
      %279 = vmatprep.subr.mxu0 0.0
      %280 = vmatpush1.xpose.msra.mxu0 0.0
      %281 = vmatprep.subr.mxu0 0.0
      %282 = vmatpush1.xpose.msra.mxu0 0.0
      %283 = vmatprep.subr.mxu0 0.0
      %284 = vmatpush1.xpose.msra.mxu0 0.0
      %285 = vmatprep.subr.mxu0 0.0
      %286 = vmatpush1.xpose.msra.mxu0 0.0
      %287 = vmatprep.subr.mxu0 0.0
      %288 = vmatpush1.xpose.msra.mxu0 0.0
      %289 = vmatprep.subr.mxu0 0.0
      %290 = vmatpush1.xpose.msra.mxu0 0.0
      %291 = vmatprep.subr.mxu0 0.0
      %292 = vmatpush1.xpose.msra.mxu0 0.0
      %293 = vmatprep.subr.mxu0 0.0
      %294 = vmatpush1.xpose.msra.mxu0 0.0
      %295 = vmatprep.subr.mxu0 0.0
      %296 = vmatpush1.xpose.msra.mxu0 0.0
      %297 = vmatprep.subr.mxu0 0.0
      %298 = vmatpush1.xpose.msra.mxu0 0.0
      %299 = vmatprep.subr.mxu0 0.0
      %300 = vmatpush1.xpose.msra.mxu0 0.0
      %301 = vmatprep.mubr.f32.mxu0 0.0
      %302 = vmatmul.mubr.f32.gmra.mrb[0].mxu0 %v229
      %v303 = vpop.f32.mrb[0].mxu0
      %v304 = vadd.f32 0.0, %v303
      %v305 = vpop.f32.mrb[0].mxu0
      %306 = vdwg.mxu0
      %p307 = scmp.eq.s32.totalorder %s20, 0
      // Predicated region
      $region41: #{memory_layer_forward.2} parent=39 // pred_check
        %p308 = pneg %p307
      $region42: #{memory_layer_forward.2} parent=39 // pred_check_branch
        %310 = sbr.rel (%p308) target = $region44
      $region43: #{memory_layer_forward.2} parent=39 // pred_region
        %p311 = scmp.eq.s32.totalorder %s21, 0
        // Predicated region
        $region45: #{memory_layer_forward.2} parent=43 // pred_check
          %p312 = pneg %p311
        $region46: #{memory_layer_forward.2} parent=43 // pred_check_branch
          %314 = sbr.rel (%p312) target = $region48
        $region47: #{memory_layer_forward.2} parent=43 // pred_region
          %vm315 = vcmask 7168
          %316 = vst.msk [vmem:[#allocation2] sm:$0xff] %vm315, -inf
          %317 = vst.msk [vmem:[#allocation3] sm:$0xff] %vm315, 0.0
        $region48: #{memory_layer_forward.2} parent=43 // pred_fallthru
          _
        %v318 = vld [vmem:[#allocation2] sm:$0xff]
        %vm319 = vcmask 130048
        %v320 = vsel %vm319, %v304, -inf
        %321 = vmax.xlane.f32.xlu0 %v320
        %v322 = vpop.xlane.xlu0 %321
        %v323 = vmax.f32 %v318, %v322
        %v324 = vld [vmem:[#allocation3] sm:$0xff]
        %v325 = vsub.f32 %v318, %v323
        %v326 = vmul.f32 %v325, 1.442695
        %v327 = vpow.pop %v326
        %v328 = vmul.f32 %v324, %v327
        %330 = vset.pattern.permute.xlu0 0
        %331 = vperm.xlu0 %330, %v323
        %v332 = vpop.permute.xlu0 %331
        %v334 = vsub.f32 %v304, %v332
        %v335 = vmul.f32 %v334, 1.442695
        %v336 = vpow.pop %v335
        %v337 = vsel %vm319, %v336, 0.0
        %338 = vadd.xlane.f32.xlu0 %v337
        %v339 = vpop.xlane.xlu0 %338
        %v340 = vadd.f32 %v328, %v339
        %vm341 = vcmask 7168
        %342 = vst.msk [vmem:[#allocation3] sm:$0xff] %vm341, %v340
        %343 = vst.msk [vmem:[#allocation2] sm:$0xff] %vm341, %v323
      $region44: #{memory_layer_forward.2} parent=39 // pred_fallthru
        _
      %p344 = scmp.eq.s32.totalorder %s20, 1
      // Predicated region
      $region49: #{memory_layer_forward.2} parent=39 // pred_check
        %p345 = pneg %p344
      $region50: #{memory_layer_forward.2} parent=39 // pred_check_branch
        %347 = sbr.rel (%p345) target = $region52
      $region51: #{memory_layer_forward.2} parent=39 // pred_region
        %p348 = scmp.eq.s32.totalorder %s21, 0
        // Predicated region
        $region53: #{memory_layer_forward.2} parent=51 // pred_check
          %p349 = pneg %p348
        $region54: #{memory_layer_forward.2} parent=51 // pred_check_branch
          %351 = sbr.rel (%p349) target = $region56
        $region55: #{memory_layer_forward.2} parent=51 // pred_region
          %vm352 = vcmask 7168
          %353 = vst.msk [vmem:[#allocation4] sm:$0xff] %vm352, 0.0
          %354 = vst.msk [vmem:[#allocation5] sm:$0xff] %vm227, 0.0
        $region56: #{memory_layer_forward.2} parent=51 // pred_fallthru
          _
        %v355 = vld [vmem:[#allocation2] sm:$0xff]
        %357 = vset.pattern.permute.xlu0 0
        %358 = vperm.xlu0 %357, %v355
        %v359 = vpop.permute.xlu0 %358
        %v361 = vsub.f32 %v304, %v359
        %v362 = vmul.f32 %v361, 1.442695
        %v363 = vpow.pop %v362
        %v364 = vld [vmem:[#allocation3] sm:$0xff]
        %366 = vset.pattern.permute.xlu0 0
        %367 = vperm.xlu0 %366, %v364
        %v368 = vpop.permute.xlu0 %367
        %v370 = vrcp.pop %v368
        %v371 = vmul.f32 %v363, %v370
        %v372 = vsub.f32 %v371, 0.0025
        %v373 = vmax.f32 %v372, 0.0
        %v374 = vmul.f32 %v373, %v371
        %v375 = vand.u32 2147483647, %v372
        %v376 = vadd.f32 %v375, 1e-12
        %v377 = vrcp.pop %v376
        %v378 = vmul.f32 %v374, %v377
        %v379 = vld [vmem:[#allocation4] sm:$0xff]
        %v380 = vand.u32 2147483647, %v378
        %vm381 = vcmask 130048
        %v382 = vsel %vm381, %v380, 0.0
        %383 = vadd.xlane.f32.xlu0 %v382
        %v384 = vpop.xlane.xlu0 %383
        %v385 = vadd.f32 %v379, %v384
        %vm386 = vcmask 7168
        %387 = vst.msk [vmem:[#allocation4] sm:$0xff] %vm386, %v385
        %v388 = vld [vmem:[#allocation5] sm:$0xff]
        %v390 = vsel %vm381, %v378, 0
        %392 = vmatprep.subr.mxu0 0.0
        %393 = vmatpush1.msra.mxu0 %v225
        %394 = vmatprep.subr.mxu0 0.0
        %395 = vmatpush1.msra.mxu0 %v226
        %396 = vmatprep.subr.mxu0 0.0
        %397 = vmatpush1.msra.mxu0 0.0
        %398 = vmatprep.subr.mxu0 0.0
        %399 = vmatpush1.msra.mxu0 0.0
        %400 = vmatprep.subr.mxu0 0.0
        %401 = vmatpush1.msra.mxu0 0.0
        %402 = vmatprep.subr.mxu0 0.0
        %403 = vmatpush1.msra.mxu0 0.0
        %404 = vmatprep.subr.mxu0 0.0
        %405 = vmatpush1.msra.mxu0 0.0
        %406 = vmatprep.subr.mxu0 0.0
        %407 = vmatpush1.msra.mxu0 0.0
        %408 = vmatprep.subr.mxu0 0.0
        %409 = vmatpush1.msra.mxu0 0.0
        %410 = vmatprep.subr.mxu0 0.0
        %411 = vmatpush1.msra.mxu0 0.0
        %412 = vmatprep.subr.mxu0 0.0
        %413 = vmatpush1.msra.mxu0 0.0
        %414 = vmatprep.subr.mxu0 0.0
        %415 = vmatpush1.msra.mxu0 0.0
        %416 = vmatprep.subr.mxu0 0.0
        %417 = vmatpush1.msra.mxu0 0.0
        %418 = vmatprep.subr.mxu0 0.0
        %419 = vmatpush1.msra.mxu0 0.0
        %420 = vmatprep.subr.mxu0 0.0
        %421 = vmatpush1.msra.mxu0 0.0
        %422 = vmatprep.subr.mxu0 0.0
        %423 = vmatpush1.msra.mxu0 0.0
        %424 = vmatprep.subr.mxu0 0.0
        %425 = vmatpush1.msra.mxu0 0.0
        %426 = vmatprep.subr.mxu0 0.0
        %427 = vmatpush1.msra.mxu0 0.0
        %428 = vmatprep.subr.mxu0 0.0
        %429 = vmatpush1.msra.mxu0 0.0
        %430 = vmatprep.subr.mxu0 0.0
        %431 = vmatpush1.msra.mxu0 0.0
        %432 = vmatprep.subr.mxu0 0.0
        %433 = vmatpush1.msra.mxu0 0.0
        %434 = vmatprep.subr.mxu0 0.0
        %435 = vmatpush1.msra.mxu0 0.0
        %436 = vmatprep.subr.mxu0 0.0
        %437 = vmatpush1.msra.mxu0 0.0
        %438 = vmatprep.subr.mxu0 0.0
        %439 = vmatpush1.msra.mxu0 0.0
        %440 = vmatprep.subr.mxu0 0.0
        %441 = vmatpush1.msra.mxu0 0.0
        %442 = vmatprep.subr.mxu0 0.0
        %443 = vmatpush1.msra.mxu0 0.0
        %444 = vmatprep.subr.mxu0 0.0
        %445 = vmatpush1.msra.mxu0 0.0
        %446 = vmatprep.subr.mxu0 0.0
        %447 = vmatpush1.msra.mxu0 0.0
        %448 = vmatprep.subr.mxu0 0.0
        %449 = vmatpush1.msra.mxu0 0.0
        %450 = vmatprep.subr.mxu0 0.0
        %451 = vmatpush1.msra.mxu0 0.0
        %452 = vmatprep.subr.mxu0 0.0
        %453 = vmatpush1.msra.mxu0 0.0
        %454 = vmatprep.subr.mxu0 0.0
        %455 = vmatpush1.msra.mxu0 0.0
        %456 = vmatprep.mubr.f32.mxu0 0.0
        %457 = vmatmul.mubr.f32.gmra.mrb[0].mxu0 %v390
        %v458 = vpop.f32.mrb[0].mxu0
        %v459 = vadd.f32 0.0, %v458
        %v460 = vpop.f32.mrb[0].mxu0
        %461 = vdwg.mxu0
        %v462 = vadd.f32 %v388, %v459
        %463 = vst.msk [vmem:[#allocation5] sm:$0xff] %vm227, %v462
        // Predicated region
        $region57: #{memory_layer_forward.2} parent=51 // pred_check
          %p464 = pneg %p348
        $region58: #{memory_layer_forward.2} parent=51 // pred_check_branch
          %466 = sbr.rel (%p464) target = $region60
        $region59: #{memory_layer_forward.2} parent=51 // pred_region
          %v467 = vld [vmem:[#allocation5] sm:$0xff]
          %v468 = vld [vmem:[#allocation4] sm:$0xff]
          %v469 = vmax.f32 %v468, 1e-12
          %471 = vset.pattern.permute.xlu0 0
          %472 = vperm.xlu0 %471, %v469
          %v473 = vpop.permute.xlu0 %472
          %v475 = vrcp.pop %v473
          %v476 = vmul.f32 %v467, %v475
          %v477 = vld [vmem:[%s2] sm:$0xff]
          %v478 = vld [vmem:[%s2 + $0x8] sm:$0xff]
          %v479 = vld [vmem:[%s2 + $0x10] sm:$0xff]
          %v480 = vld [vmem:[%s2 + $0x18] sm:$0xff]
          %v481 = vld [vmem:[%s3] sm:$0xff]
          %v482 = vld [vmem:[%s3 + $0x8] sm:$0xff]
          %v483 = vld [vmem:[%s3 + $0x10] sm:$0xff]
          %v484 = vld [vmem:[%s3 + $0x18] sm:$0xff]
          %v486 = vsel %vm227, %v476, 0
          %488 = vmatprep.subr.mxu0 0.0
          %489 = vmatpush1.msra.mxu0 %v481
          %490 = vmatprep.subr.mxu0 0.0
          %491 = vmatpush1.msra.mxu0 %v482
          %492 = vmatprep.subr.mxu0 0.0
          %493 = vmatpush1.msra.mxu0 %v483
          %494 = vmatprep.subr.mxu0 0.0
          %495 = vmatpush1.msra.mxu0 %v484
          %496 = vmatprep.subr.mxu0 0.0
          %497 = vmatpush1.msra.mxu0 0.0
          %498 = vmatprep.subr.mxu0 0.0
          %499 = vmatpush1.msra.mxu0 0.0
          %500 = vmatprep.subr.mxu0 0.0
          %501 = vmatpush1.msra.mxu0 0.0
          %502 = vmatprep.subr.mxu0 0.0
          %503 = vmatpush1.msra.mxu0 0.0
          %504 = vmatprep.subr.mxu0 0.0
          %505 = vmatpush1.msra.mxu0 0.0
          %506 = vmatprep.subr.mxu0 0.0
          %507 = vmatpush1.msra.mxu0 0.0
          %508 = vmatprep.subr.mxu0 0.0
          %509 = vmatpush1.msra.mxu0 0.0
          %510 = vmatprep.subr.mxu0 0.0
          %511 = vmatpush1.msra.mxu0 0.0
          %512 = vmatprep.subr.mxu0 0.0
          %513 = vmatpush1.msra.mxu0 0.0
          %514 = vmatprep.subr.mxu0 0.0
          %515 = vmatpush1.msra.mxu0 0.0
          %516 = vmatprep.subr.mxu0 0.0
          %517 = vmatpush1.msra.mxu0 0.0
          %518 = vmatprep.subr.mxu0 0.0
          %519 = vmatpush1.msra.mxu0 0.0
          %520 = vmatprep.subr.mxu0 0.0
          %521 = vmatpush1.msra.mxu0 0.0
          %522 = vmatprep.subr.mxu0 0.0
          %523 = vmatpush1.msra.mxu0 0.0
          %524 = vmatprep.subr.mxu0 0.0
          %525 = vmatpush1.msra.mxu0 0.0
          %526 = vmatprep.subr.mxu0 0.0
          %527 = vmatpush1.msra.mxu0 0.0
          %528 = vmatprep.subr.mxu0 0.0
          %529 = vmatpush1.msra.mxu0 0.0
          %530 = vmatprep.subr.mxu0 0.0
          %531 = vmatpush1.msra.mxu0 0.0
          %532 = vmatprep.subr.mxu0 0.0
          %533 = vmatpush1.msra.mxu0 0.0
          %534 = vmatprep.subr.mxu0 0.0
          %535 = vmatpush1.msra.mxu0 0.0
          %536 = vmatprep.subr.mxu0 0.0
          %537 = vmatpush1.msra.mxu0 0.0
          %538 = vmatprep.subr.mxu0 0.0
          %539 = vmatpush1.msra.mxu0 0.0
          %540 = vmatprep.subr.mxu0 0.0
          %541 = vmatpush1.msra.mxu0 0.0
          %542 = vmatprep.subr.mxu0 0.0
          %543 = vmatpush1.msra.mxu0 0.0
          %544 = vmatprep.subr.mxu0 0.0
          %545 = vmatpush1.msra.mxu0 0.0
          %546 = vmatprep.subr.mxu0 0.0
          %547 = vmatpush1.msra.mxu0 0.0
          %548 = vmatprep.subr.mxu0 0.0
          %549 = vmatpush1.msra.mxu0 0.0
          %550 = vmatprep.subr.mxu0 0.0
          %551 = vmatpush1.msra.mxu0 0.0
          %552 = vmatprep.mubr.f32.mxu0 0.0
          %553 = vmatmul.mubr.f32.gmra.mrb[0].mxu0 %v486
          %v554 = vpop.f32.mrb[0].mxu0
          %v555 = vadd.f32 0.0, %v554
          %v556 = vpop.f32.mrb[0].mxu0
          %557 = vdwg.mxu0
          %558 = vmatprep.subr.mxu0 0.0
          %559 = vmatpush1.msra.mxu0 %v477
          %560 = vmatprep.subr.mxu0 0.0
          %561 = vmatpush1.msra.mxu0 %v478
          %562 = vmatprep.subr.mxu0 0.0
          %563 = vmatpush1.msra.mxu0 %v479
          %564 = vmatprep.subr.mxu0 0.0
          %565 = vmatpush1.msra.mxu0 %v480
          %566 = vmatprep.subr.mxu0 0.0
          %567 = vmatpush1.msra.mxu0 0.0
          %568 = vmatprep.subr.mxu0 0.0
          %569 = vmatpush1.msra.mxu0 0.0
          %570 = vmatprep.subr.mxu0 0.0
          %571 = vmatpush1.msra.mxu0 0.0
          %572 = vmatprep.subr.mxu0 0.0
          %573 = vmatpush1.msra.mxu0 0.0
          %574 = vmatprep.subr.mxu0 0.0
          %575 = vmatpush1.msra.mxu0 0.0
          %576 = vmatprep.subr.mxu0 0.0
          %577 = vmatpush1.msra.mxu0 0.0
          %578 = vmatprep.subr.mxu0 0.0
          %579 = vmatpush1.msra.mxu0 0.0
          %580 = vmatprep.subr.mxu0 0.0
          %581 = vmatpush1.msra.mxu0 0.0
          %582 = vmatprep.subr.mxu0 0.0
          %583 = vmatpush1.msra.mxu0 0.0
          %584 = vmatprep.subr.mxu0 0.0
          %585 = vmatpush1.msra.mxu0 0.0
          %586 = vmatprep.subr.mxu0 0.0
          %587 = vmatpush1.msra.mxu0 0.0
          %588 = vmatprep.subr.mxu0 0.0
          %589 = vmatpush1.msra.mxu0 0.0
          %590 = vmatprep.subr.mxu0 0.0
          %591 = vmatpush1.msra.mxu0 0.0
          %592 = vmatprep.subr.mxu0 0.0
          %593 = vmatpush1.msra.mxu0 0.0
          %594 = vmatprep.subr.mxu0 0.0
          %595 = vmatpush1.msra.mxu0 0.0
          %596 = vmatprep.subr.mxu0 0.0
          %597 = vmatpush1.msra.mxu0 0.0
          %598 = vmatprep.subr.mxu0 0.0
          %599 = vmatpush1.msra.mxu0 0.0
          %600 = vmatprep.subr.mxu0 0.0
          %601 = vmatpush1.msra.mxu0 0.0
          %602 = vmatprep.subr.mxu0 0.0
          %603 = vmatpush1.msra.mxu0 0.0
          %604 = vmatprep.subr.mxu0 0.0
          %605 = vmatpush1.msra.mxu0 0.0
          %606 = vmatprep.subr.mxu0 0.0
          %607 = vmatpush1.msra.mxu0 0.0
          %608 = vmatprep.subr.mxu0 0.0
          %609 = vmatpush1.msra.mxu0 0.0
          %610 = vmatprep.subr.mxu0 0.0
          %611 = vmatpush1.msra.mxu0 0.0
          %612 = vmatprep.subr.mxu0 0.0
          %613 = vmatpush1.msra.mxu0 0.0
          %614 = vmatprep.subr.mxu0 0.0
          %615 = vmatpush1.msra.mxu0 0.0
          %616 = vmatprep.subr.mxu0 0.0
          %617 = vmatpush1.msra.mxu0 0.0
          %618 = vmatprep.subr.mxu0 0.0
          %619 = vmatpush1.msra.mxu0 0.0
          %620 = vmatprep.subr.mxu0 0.0
          %621 = vmatpush1.msra.mxu0 0.0
          %622 = vmatprep.mubr.f32.mxu0 0.0
          %623 = vmatmul.mubr.f32.gmra.mrb[0].mxu0 %v229
          %v624 = vpop.f32.mrb[0].mxu0
          %v625 = vadd.f32 %v555, %v624
          %v626 = vpop.f32.mrb[0].mxu0
          %627 = vdwg.mxu0
          %v628 = vld [vmem:[%s4] sm:$0x1]
          %v630 = vlaneseq
          %v631 = vshrl.u32 %v630, 7
          %v632 = vsub.s32 0, %v631
          %v633 = vrot.slane %v628, %v632
          %v635 = vadd.f32 %v625, %v633
          %v636 = vxor.u32 %v635, 2147483648
          %v637 = vmul.f32 %v636, 1.442695
          %v638 = vpow.pop %v637
          %v639 = vadd.f32 %v638, 1.0
          %v640 = vrcp.pop %v639
          %v641 = vmul.f32 1.0, %v640
          %v642 = vsub.f32 1.0, %v641
          %v643 = vmul.f32 %v642, %v224
          %v644 = vmul.f32 %v641, %v476
          %v645 = vadd.f32 %v643, %v644
          %646 = vst.msk [vmem:[%s5] sm:$0xff] %vm227, %v645
        $region60: #{memory_layer_forward.2} parent=51 // pred_fallthru
          _
      $region52: #{memory_layer_forward.2} parent=39 // pred_fallthru
        _
      // Predicated region
      $region61: #{memory_layer_forward.2} parent=39 // pred_check
        %p647 = pneg %p151
      $region62: #{memory_layer_forward.2} parent=39 // pred_check_branch
        %649 = sbr.rel (%p647) target = $region64
      $region63: #{memory_layer_forward.2} parent=39 // pred_region
        _
      $region64: #{memory_layer_forward.2} parent=39 // pred_fallthru
        _
      // Predicated region
      $region65: #{memory_layer_forward.2} parent=39 // pred_check
        %p650 = pneg %p151
      $region66: #{memory_layer_forward.2} parent=39 // pred_check_branch
        %652 = sbr.rel (%p650) target = $region68
      $region67: #{memory_layer_forward.2} parent=39 // pred_region
        _
      $region68: #{memory_layer_forward.2} parent=39 // pred_fallthru
        _
    $region40: #{memory_layer_forward.2} parent=5 // pred_fallthru
      _
    %p653 = scmp.le.s32.totalorder 2, %s11
    // Predicated region
    $region69: #{memory_layer_forward.2} parent=5 // pred_check
      %p654 = pneg %p653
    $region70: #{memory_layer_forward.2} parent=5 // pred_check_branch
      %656 = sbr.rel (%p654) target = $region72
    $region71: #{memory_layer_forward.2} parent=5 // pred_region
      %s657 = ssub.s32 %s11, 2
    $region72: #{memory_layer_forward.2} parent=5 // pred_fallthru
      _
  $region6: #{memory_layer_forward.2} parent=0 // loop_footer
    %s15 = sadd.s32 1, %s11
  $region7: #{memory_layer_forward.2} parent=0 // loop_footer_branch
    %10 = sbr.rel target = $region3
  $region8: #{memory_layer_forward.2} parent=0 // loop_exit
    _

</llo_original>
